<compile_context>
chip_gen: v7x
topology: tpu7x:2x2x1
jax: 0.10.0
libtpu: 0.0.40
codegen_flags: <defaults>
</compile_context>

<pallas_src>
import functools

import jax
import jax.numpy as jnp
from jax.experimental import pallas as pl
from jax.experimental.pallas import tpu as pltpu

HIDDEN1, HIDDEN2 = 400, 300
_LANE = 128


def _round_up(n, m):
    return ((n + m - 1) // m) * m


def _actor_kernel(max_action, mm_dtype,
                  x_ref, w1_ref, b1_ref, w2_ref, b2_ref, w3_ref, b3_ref,
                  o_ref):
    # Matmuls in mm_dtype (f32 or bf16) with f32 accumulation; bias add, tanh
    # and the max_action scale stay in f32 (EUP/VPU f32 path, safe on v5e).
    x = x_ref[...].astype(mm_dtype)                           # (TB, S)
    h1 = jnp.tanh(
        jnp.dot(x, w1_ref[...], preferred_element_type=jnp.float32)
        + b1_ref[...])                                        # (TB, H1p) f32
    h2 = jnp.tanh(
        jnp.dot(h1.astype(mm_dtype), w2_ref[...],
                preferred_element_type=jnp.float32)
        + b2_ref[...])                                        # (TB, H2p) f32
    y = max_action * jnp.tanh(
        jnp.dot(h2.astype(mm_dtype), w3_ref[...],
                preferred_element_type=jnp.float32)
        + b3_ref[...])                                        # (TB, Ap) f32
    o_ref[...] = y.astype(o_ref.dtype)


def init_actor_params(key, state_dim, action_dim):
    """Deterministic init matching nn.Linear default (U[-1/sqrt(fan_in), +]).

    Weights are stored as (in_features, out_features), i.e. the transpose of
    PyTorch's nn.Linear weight, so each layer is x @ W + b on the MXU.
    """
    def linear(k, fan_in, fan_out):
        kw, kb = jax.random.split(k)
        bound = 1.0 / jnp.sqrt(jnp.float32(fan_in))
        w = jax.random.uniform(kw, (fan_in, fan_out), jnp.float32, -bound, bound)
        b = jax.random.uniform(kb, (1, fan_out), jnp.float32, -bound, bound)
        return w, b

    k1, k2, k3 = jax.random.split(key, 3)
    w1, b1 = linear(k1, state_dim, HIDDEN1)
    w2, b2 = linear(k2, HIDDEN1, HIDDEN2)
    w3, b3 = linear(k3, HIDDEN2, action_dim)
    return {"w1": w1, "b1": b1, "w2": w2, "b2": b2, "w3": w3, "b3": b3}


def pad_actor_params(params, *, weight_dtype=jnp.float32):
    """Zero-pad feature dims to lane (128) multiples; do this once at init.

    Zero rows/cols contribute exactly 0 to every dot product and tanh(0)*0 = 0,
    so padded results are identical to the unpadded network. Weights may be
    down-cast (e.g. bf16) to halve their HBM traffic; biases stay f32.
    """
    s = params["w1"].shape[0]
    a = params["w3"].shape[1]
    h1p = _round_up(HIDDEN1, _LANE)      # 512
    h2p = _round_up(HIDDEN2, _LANE)      # 384
    ap = _round_up(a, _LANE)             # 128

    def pad_w(w, rows, cols):
        w = jnp.pad(w, ((0, rows - w.shape[0]), (0, cols - w.shape[1])))
        return w.astype(weight_dtype)

    def pad_b(b, cols):
        return jnp.pad(b, ((0, 0), (0, cols - b.shape[1]))).astype(jnp.float32)

    return {
        "w1": pad_w(params["w1"], s, h1p), "b1": pad_b(params["b1"], h1p),
        "w2": pad_w(params["w2"], h1p, h2p), "b2": pad_b(params["b2"], h2p),
        "w3": pad_w(params["w3"], h2p, ap), "b3": pad_b(params["b3"], ap),
    }


def actor_forward(x, pparams, max_action, action_dim, *, block_batch=128):
    """x: (B, state_dim) f32. pparams: padded params from pad_actor_params."""
    B, S = x.shape
    H1 = pparams["w1"].shape[1]
    H2 = pparams["w2"].shape[1]
    Ap = pparams["w3"].shape[1]

    # Batch tiling: full batch as one block when small (rounded to sublane
    # granularity), otherwise 128-row tiles pipelined over a 1-D grid.
    TB = block_batch if B >= block_batch else _round_up(max(B, 1), 8)
    B_pad = _round_up(B, TB)
    if B_pad != B:
        x = jnp.pad(x, ((0, B_pad - B), (0, 0)))
    grid = (B_pad // TB,)

    mm_dtype = pparams["w1"].dtype
    kernel = functools.partial(_actor_kernel, float(max_action), mm_dtype)

    weight_bytes = sum(int(pparams[k].size) * pparams[k].dtype.itemsize
                       for k in ("w1", "b1", "w2", "b2", "w3", "b3"))
    cost = pl.CostEstimate(
        flops=2 * B_pad * (S * H1 + H1 * H2 + H2 * Ap),
        transcendentals=B_pad * (H1 + H2 + Ap),
        bytes_accessed=int(x.size) * x.dtype.itemsize + weight_bytes
        + B_pad * Ap * 4,
    )

    out = pl.pallas_call(
        kernel,
        out_shape=jax.ShapeDtypeStruct((B_pad, Ap), jnp.float32),
        grid=grid,
        in_specs=[
            pl.BlockSpec((TB, S), lambda i: (i, 0)),      # x: tiled over batch
            pl.BlockSpec((S, H1), lambda i: (0, 0)),      # weights/biases:
            pl.BlockSpec((1, H1), lambda i: (0, 0)),      # constant index_map
            pl.BlockSpec((H1, H2), lambda i: (0, 0)),     # -> loaded once,
            pl.BlockSpec((1, H2), lambda i: (0, 0)),      #    stay resident
            pl.BlockSpec((H2, Ap), lambda i: (0, 0)),
            pl.BlockSpec((1, Ap), lambda i: (0, 0)),
        ],
        out_specs=pl.BlockSpec((TB, Ap), lambda i: (i, 0)),
        compiler_params=pltpu.CompilerParams(
            dimension_semantics=("parallel",)),           # v7x: 2 TCs
        cost_estimate=cost,
    )(x, pparams["w1"], pparams["b1"], pparams["w2"], pparams["b2"],
      pparams["w3"], pparams["b3"])

    return out[:B, :action_dim]


def actor_reference(x, params, max_action):
    h1 = jnp.tanh(x @ params["w1"] + params["b1"])
    h2 = jnp.tanh(h1 @ params["w2"] + params["b2"])
    return max_action * jnp.tanh(h2 @ params["w3"] + params["b3"])


if __name__ == "__main__":
    state_dim, action_dim, max_action = 17, 6, 2.0

    key = jax.random.PRNGKey(0)
    kx, kp = jax.random.split(key)
    params = init_actor_params(kp, state_dim, action_dim)

    # --- f32 path, small batch (single tile): exact vs reference -------------
    pparams_f32 = pad_actor_params(params, weight_dtype=jnp.float32)
    x_small = jax.random.normal(kx, (8, state_dim), jnp.float32)
    out = jax.block_until_ready(
        actor_forward(x_small, pparams_f32, max_action, action_dim))
    ref = actor_reference(x_small, params, max_action)
    assert out.shape == (8, action_dim)
    assert jnp.allclose(out, ref, atol=1e-5, rtol=1e-5)

    # --- f32 path, batch not a multiple of the tile (exercises the grid) -----
    x_big = jax.random.normal(jax.random.PRNGKey(1), (192, state_dim),
                              jnp.float32)
    out_big = jax.block_until_ready(
        actor_forward(x_big, pparams_f32, max_action, action_dim))
    ref_big = actor_reference(x_big, params, max_action)
    assert out_big.shape == (192, action_dim)
    assert jnp.allclose(out_big, ref_big, atol=1e-5, rtol=1e-5)

    # --- bf16-weight path (half the weight DMA; bf16-native MXU on v6e/v7x) --
    pparams_bf16 = pad_actor_params(params, weight_dtype=jnp.bfloat16)
    out_bf16 = jax.block_until_ready(
        actor_forward(x_big, pparams_bf16, max_action, action_dim))
    assert out_bf16.shape == (192, action_dim)
    assert jnp.allclose(out_bf16, ref_big, atol=5e-2, rtol=5e-2)

    print("KERNEL_OK")
</pallas_src>

<mosaic_0001>
module attributes {stable_mosaic.version = 11 : i64} {
  func.func @_actor_kernel(%arg0: i32, %arg1: memref<8x17xf32, #tpu.memory_space<vmem>>, %arg2: memref<17x512xf32, #tpu.memory_space<vmem>>, %arg3: memref<1x512xf32, #tpu.memory_space<vmem>>, %arg4: memref<512x384xf32, #tpu.memory_space<vmem>>, %arg5: memref<1x384xf32, #tpu.memory_space<vmem>>, %arg6: memref<384x128xf32, #tpu.memory_space<vmem>>, %arg7: memref<1x128xf32, #tpu.memory_space<vmem>>, %arg8: memref<8x128xf32, #tpu.memory_space<vmem>>) attributes {dimension_semantics = [#tpu.dimension_semantics<parallel>], iteration_bounds = array<i64: 1>, scalar_prefetch = 0 : i64, scratch_operands = 0 : i64, tpu.core_type = #tpu.core_type<tc>, window_params = [{transform_indices = @transform_0, window_bounds = array<i64: 8, 17>}, {pipeline_mode = #tpu.pipeline_mode<synchronous>, transform_indices = @transform_1, window_bounds = array<i64: 17, 512>}, {pipeline_mode = #tpu.pipeline_mode<synchronous>, transform_indices = @transform_2, window_bounds = array<i64: 1, 512>}, {pipeline_mode = #tpu.pipeline_mode<synchronous>, transform_indices = @transform_3, window_bounds = array<i64: 512, 384>}, {pipeline_mode = #tpu.pipeline_mode<synchronous>, transform_indices = @transform_4, window_bounds = array<i64: 1, 384>}, {pipeline_mode = #tpu.pipeline_mode<synchronous>, transform_indices = @transform_5, window_bounds = array<i64: 384, 128>}, {pipeline_mode = #tpu.pipeline_mode<synchronous>, transform_indices = @transform_6, window_bounds = array<i64: 1, 128>}, {transform_indices = @transform_7, window_bounds = array<i64: 8, 128>}]} {
    %c0 = arith.constant 0 : index
    %c0_0 = arith.constant 0 : index
    %0 = vector.load %arg1[%c0, %c0_0] : memref<8x17xf32, #tpu.memory_space<vmem>>, vector<8x17xf32>
    %c0_1 = arith.constant 0 : index
    %c0_2 = arith.constant 0 : index
    %1 = vector.load %arg2[%c0_1, %c0_2] : memref<17x512xf32, #tpu.memory_space<vmem>>, vector<17x512xf32>
    %cst = arith.constant dense<0.000000e+00> : vector<8x512xf32>
    %2 = tpu.matmul %0, %1, %cst {dimension_numbers = #tpu.dot_dimension_numbers<[1], [0], [0], [1], [0, 0, 1, 1], [], []>} : vector<8x17xf32>, vector<17x512xf32>, vector<8x512xf32> -> vector<8x512xf32>
    %c0_3 = arith.constant 0 : index
    %c0_4 = arith.constant 0 : index
    %3 = vector.load %arg3[%c0_3, %c0_4] : memref<1x512xf32, #tpu.memory_space<vmem>>, vector<1x512xf32>
    %4 = vector.broadcast %3 : vector<1x512xf32> to vector<8x512xf32>
    %5 = arith.addf %2, %4 : vector<8x512xf32>
    %6 = math.tanh %5 : vector<8x512xf32>
    %c0_5 = arith.constant 0 : index
    %c0_6 = arith.constant 0 : index
    %7 = vector.load %arg4[%c0_5, %c0_6] : memref<512x384xf32, #tpu.memory_space<vmem>>, vector<512x384xf32>
    %cst_7 = arith.constant dense<0.000000e+00> : vector<8x384xf32>
    %8 = tpu.matmul %6, %7, %cst_7 {dimension_numbers = #tpu.dot_dimension_numbers<[1], [0], [0], [1], [0, 0, 1, 1], [], []>} : vector<8x512xf32>, vector<512x384xf32>, vector<8x384xf32> -> vector<8x384xf32>
    %c0_8 = arith.constant 0 : index
    %c0_9 = arith.constant 0 : index
    %9 = vector.load %arg5[%c0_8, %c0_9] : memref<1x384xf32, #tpu.memory_space<vmem>>, vector<1x384xf32>
    %10 = vector.broadcast %9 : vector<1x384xf32> to vector<8x384xf32>
    %11 = arith.addf %8, %10 : vector<8x384xf32>
    %12 = math.tanh %11 : vector<8x384xf32>
    %c0_10 = arith.constant 0 : index
    %c0_11 = arith.constant 0 : index
    %13 = vector.load %arg6[%c0_10, %c0_11] : memref<384x128xf32, #tpu.memory_space<vmem>>, vector<384x128xf32>
    %cst_12 = arith.constant dense<0.000000e+00> : vector<8x128xf32>
    %14 = tpu.matmul %12, %13, %cst_12 {dimension_numbers = #tpu.dot_dimension_numbers<[1], [0], [0], [1], [0, 0, 1, 1], [], []>} : vector<8x384xf32>, vector<384x128xf32>, vector<8x128xf32> -> vector<8x128xf32>
    %c0_13 = arith.constant 0 : index
    %c0_14 = arith.constant 0 : index
    %15 = vector.load %arg7[%c0_13, %c0_14] : memref<1x128xf32, #tpu.memory_space<vmem>>, vector<1x128xf32>
    %16 = vector.broadcast %15 : vector<1x128xf32> to vector<8x128xf32>
    %17 = arith.addf %14, %16 : vector<8x128xf32>
    %18 = math.tanh %17 : vector<8x128xf32>
    %cst_15 = arith.constant 2.000000e+00 : f32
    %19 = vector.broadcast %cst_15 : f32 to vector<8x128xf32>
    %20 = arith.mulf %19, %18 : vector<8x128xf32>
    %c0_16 = arith.constant 0 : index
    %c0_17 = arith.constant 0 : index
    %21 = vector.load %arg8[%c0_16, %c0_17] : memref<8x128xf32, #tpu.memory_space<vmem>>, vector<8x128xf32>
    tpu.vector_store %arg8[%c0_16, %c0_17], %20 {strides = array<i32>} : memref<8x128xf32, #tpu.memory_space<vmem>>, vector<8x128xf32>,
    return
  }
  func.func @transform_0(%arg0: i32) -> (i32, i32) {
    %c0_i32 = arith.constant 0 : i32
    %c0_i32_0 = arith.constant 0 : i32
    return %arg0, %c0_i32 : i32, i32
  }
  func.func @transform_1(%arg0: i32) -> (i32, i32) {
    %c0_i32 = arith.constant 0 : i32
    %c0_i32_0 = arith.constant 0 : i32
    %c0_i32_1 = arith.constant 0 : i32
    return %c0_i32, %c0_i32_0 : i32, i32
  }
  func.func @transform_2(%arg0: i32) -> (i32, i32) {
    %c0_i32 = arith.constant 0 : i32
    %c0_i32_0 = arith.constant 0 : i32
    %c0_i32_1 = arith.constant 0 : i32
    return %c0_i32, %c0_i32_0 : i32, i32
  }
  func.func @transform_3(%arg0: i32) -> (i32, i32) {
    %c0_i32 = arith.constant 0 : i32
    %c0_i32_0 = arith.constant 0 : i32
    %c0_i32_1 = arith.constant 0 : i32
    return %c0_i32, %c0_i32_0 : i32, i32
  }
  func.func @transform_4(%arg0: i32) -> (i32, i32) {
    %c0_i32 = arith.constant 0 : i32
    %c0_i32_0 = arith.constant 0 : i32
    %c0_i32_1 = arith.constant 0 : i32
    return %c0_i32, %c0_i32_0 : i32, i32
  }
  func.func @transform_5(%arg0: i32) -> (i32, i32) {
    %c0_i32 = arith.constant 0 : i32
    %c0_i32_0 = arith.constant 0 : i32
    %c0_i32_1 = arith.constant 0 : i32
    return %c0_i32, %c0_i32_0 : i32, i32
  }
  func.func @transform_6(%arg0: i32) -> (i32, i32) {
    %c0_i32 = arith.constant 0 : i32
    %c0_i32_0 = arith.constant 0 : i32
    %c0_i32_1 = arith.constant 0 : i32
    return %c0_i32, %c0_i32_0 : i32, i32
  }
  func.func @transform_7(%arg0: i32) -> (i32, i32) {
    %c0_i32 = arith.constant 0 : i32
    %c0_i32_0 = arith.constant 0 : i32
    return %arg0, %c0_i32 : i32, i32
  }
}

</mosaic_0001>

<llo_original>
// kernel: tpu_custom_call.1
$region0: #{tpu_custom_call.1}
  #allocation0 [shape = 'u32[]', space=smem, size = 0x4, offset = 0x4, fixed_abs, tag = 'smem constant byte address 0x4 - core index']
  #allocation1 [shape = 'u32[144,128]{1,0:T(1,128)}', space=vmem, size = 0x12000, scoped, tag = 'internal scratch']
  %s0 = inlined_call_operand.hbm [shape: f32[8,17], index: 0, kind: input, shape index: {}]
  %s1 = inlined_call_operand.hbm [shape: f32[17,512], index: 1, kind: input, shape index: {}]
  %s2 = inlined_call_operand.vmem [shape: f32[1,512], index: 2, kind: input, shape index: {}]
  %s3 = inlined_call_operand.hbm [shape: f32[512,384], index: 3, kind: input, shape index: {}]
  %s4 = inlined_call_operand.vmem [shape: f32[1,384], index: 4, kind: input, shape index: {}]
  %s5 = inlined_call_operand.hbm [shape: f32[384,128], index: 5, kind: input, shape index: {}]
  %s6 = inlined_call_operand.vmem [shape: f32[1,128], index: 6, kind: input, shape index: {}]
  %s7 = inlined_call_operand.hbm [shape: f32[8,128], index: 7, kind: output, shape index: {}]
  %s8 = sld [smem:[#allocation0]]
  $region54: #{tpu_custom_call.1} parent=0
    _
  %s10 = ssub.s32 1, %s8
  %s11 = scalar_select 0, %s10, %s8
  $region1: #{tpu_custom_call.1} parent=0
    #allocation2 [shape = 'u8[4096]{0}', space=vmem, size = 0x1000, scoped, tag = 'input window, operand 0, single buffered']
    #allocation3 [shape = 's32[1]{0}', space=sflag, size = 0x4, scoped, tag = 'scoped memory for tpu_custom_call.1']
    #allocation4 [shape = 's32[1]{0}', space=sflag, size = 0x4, scoped, tag = 'scoped memory for tpu_custom_call.1']
    #allocation5 [shape = 'u8[49152]{0}', space=vmem, size = 0xc000, scoped, tag = 'input window, operand 1, single buffered']
    #allocation6 [shape = 's32[1]{0}', space=sflag, size = 0x4, scoped, tag = 'scoped memory for tpu_custom_call.1']
    #allocation7 [shape = 'u8[786432]{0}', space=vmem, size = 0xc0000, scoped, tag = 'input window, operand 3, single buffered']
    #allocation8 [shape = 'u8[196608]{0}', space=vmem, size = 0x30000, scoped, tag = 'input window, operand 5, single buffered']
    #allocation9 [shape = 's32[1]{0}', space=sflag, size = 0x4, scoped, tag = 'scoped memory for tpu_custom_call.1']
    #allocation10 [shape = 'u8[4096]{0}', space=vmem, size = 0x1000, scoped, tag = 'output window, operand 0, single buffered']
    %12 = vsyncpa [#allocation3], 0
    %13 = vsyncpa [#allocation6], 0
    %14 = vsyncpa [#allocation9], 0
    %15 = vsyncpa [#allocation4], 0
    // Predicated region
    $region2: #{tpu_custom_call.1} parent=1 // pred_check
      _
    $region3: #{tpu_custom_call.1} parent=1 // pred_check_branch
      %17 = sbr.rel (0) target = $region5
    $region4: #{tpu_custom_call.1} parent=1 // pred_region
      %s19 = ssub.s32 128, 128
      %20 = vsyncadd [#allocation3], %s19
      %s22 = sshll.u32 [#allocation2], 4
      %s23 = int_to_ptr.vmem [resolvable:$true] %s22
      %25 = dma.hbm_to_vmem [thread:$0]  %s0, 128, %s23, [#allocation3]
    $region5: #{tpu_custom_call.1} parent=1 // pred_fallthru
      _
    // Predicated region
    $region6: #{tpu_custom_call.1} parent=1 // pred_check
      _
    $region7: #{tpu_custom_call.1} parent=1 // pred_check_branch
      %27 = sbr.rel (0) target = $region9
    $region8: #{tpu_custom_call.1} parent=1 // pred_region
      %s29 = ssub.s32 1536, 1536
      %30 = vsyncadd [#allocation6], %s29
      %s31 = sshll.u32 [#allocation5], 4
      %s32 = int_to_ptr.vmem [resolvable:$true] %s31
      %37 = dma.hbm_to_vmem [thread:$0]  %s1, 1536, %s32, [#allocation6], 512, 512, 32
    $region9: #{tpu_custom_call.1} parent=1 // pred_fallthru
      _
    // Predicated region
    $region10: #{tpu_custom_call.1} parent=1 // pred_check
      _
    $region11: #{tpu_custom_call.1} parent=1 // pred_check_branch
      %39 = sbr.rel (0) target = $region13
    $region12: #{tpu_custom_call.1} parent=1 // pred_region
      _
    $region13: #{tpu_custom_call.1} parent=1 // pred_fallthru
      _
    // Predicated region
    $region14: #{tpu_custom_call.1} parent=1 // pred_check
      _
    $region15: #{tpu_custom_call.1} parent=1 // pred_check_branch
      %41 = sbr.rel (0) target = $region17
    $region16: #{tpu_custom_call.1} parent=1 // pred_region
      %s43 = ssub.s32 24576, 24576
      %44 = vsyncadd [#allocation6], %s43
      %s45 = sshll.u32 [#allocation7], 4
      %s46 = int_to_ptr.vmem [resolvable:$true] %s45
      %51 = dma.hbm_to_vmem [thread:$0]  %s3, 24576, %s46, [#allocation6], 384, 384, 24
    $region17: #{tpu_custom_call.1} parent=1 // pred_fallthru
      _
    // Predicated region
    $region18: #{tpu_custom_call.1} parent=1 // pred_check
      _
    $region19: #{tpu_custom_call.1} parent=1 // pred_check_branch
      %53 = sbr.rel (0) target = $region21
    $region20: #{tpu_custom_call.1} parent=1 // pred_region
      _
    $region21: #{tpu_custom_call.1} parent=1 // pred_fallthru
      _
    // Predicated region
    $region22: #{tpu_custom_call.1} parent=1 // pred_check
      _
    $region23: #{tpu_custom_call.1} parent=1 // pred_check_branch
      %55 = sbr.rel (0) target = $region25
    $region24: #{tpu_custom_call.1} parent=1 // pred_region
      %s57 = ssub.s32 6144, 6144
      %58 = vsyncadd [#allocation9], %s57
      %s59 = sshll.u32 [#allocation8], 4
      %s60 = int_to_ptr.vmem [resolvable:$true] %s59
      %65 = dma.hbm_to_vmem [thread:$0]  %s5, 6144, %s60, [#allocation9], 128, 128, 8
    $region25: #{tpu_custom_call.1} parent=1 // pred_fallthru
      _
    // Predicated region
    $region26: #{tpu_custom_call.1} parent=1 // pred_check
      _
    $region27: #{tpu_custom_call.1} parent=1 // pred_check_branch
      %67 = sbr.rel (0) target = $region29
    $region28: #{tpu_custom_call.1} parent=1 // pred_region
      _
    $region29: #{tpu_custom_call.1} parent=1 // pred_fallthru
      _
    // Predicated region
    $region30: #{tpu_custom_call.1} parent=1 // pred_check
      _
    $region31: #{tpu_custom_call.1} parent=1 // pred_check_branch
      %69 = sbr.rel (0) target = $region33
    $region32: #{tpu_custom_call.1} parent=1 // pred_region
      %70 = dma.done [#allocation3], 128
    $region33: #{tpu_custom_call.1} parent=1 // pred_fallthru
      _
    // Predicated region
    $region34: #{tpu_custom_call.1} parent=1 // pred_check
      _
    $region35: #{tpu_custom_call.1} parent=1 // pred_check_branch
      %72 = sbr.rel (0) target = $region37
    $region36: #{tpu_custom_call.1} parent=1 // pred_region
      %73 = dma.done [#allocation6], 1536
    $region37: #{tpu_custom_call.1} parent=1 // pred_fallthru
      _
    // Predicated region
    $region38: #{tpu_custom_call.1} parent=1 // pred_check
      _
    $region39: #{tpu_custom_call.1} parent=1 // pred_check_branch
      %75 = sbr.rel (0) target = $region41
    $region40: #{tpu_custom_call.1} parent=1 // pred_region
      %76 = dma.done [#allocation6], 24576
    $region41: #{tpu_custom_call.1} parent=1 // pred_fallthru
      _
    // Predicated region
    $region42: #{tpu_custom_call.1} parent=1 // pred_check
      _
    $region43: #{tpu_custom_call.1} parent=1 // pred_check_branch
      %78 = sbr.rel (0) target = $region45
    $region44: #{tpu_custom_call.1} parent=1 // pred_region
      %79 = dma.done [#allocation9], 6144
    $region45: #{tpu_custom_call.1} parent=1 // pred_fallthru
      _
    %v80 = vld [vmem:[#allocation2] sm:$0xff]
    %v81 = vld [vmem:[#allocation5] sm:$0xff]
    %v82 = vld [vmem:[#allocation5 + $0x8] sm:$0xff]
    %v83 = vld [vmem:[#allocation5 + $0x10] sm:$0xff]
    %v84 = vld [vmem:[#allocation5 + $0x18] sm:$0xff]
    %v85 = vld [vmem:[#allocation5 + $0x20] sm:$0xff]
    %v86 = vld [vmem:[#allocation5 + $0x28] sm:$0xff]
    %v87 = vld [vmem:[#allocation5 + $0x30] sm:$0xff]
    %v88 = vld [vmem:[#allocation5 + $0x38] sm:$0xff]
    %v89 = vld [vmem:[#allocation5 + $0x40] sm:$0x1]
    %v90 = vld [vmem:[#allocation5 + $0x48] sm:$0x1]
    %v91 = vld [vmem:[#allocation5 + $0x50] sm:$0x1]
    %v92 = vld [vmem:[#allocation5 + $0x58] sm:$0x1]
    %v93 = vld [vmem:[%s2] sm:$0xf]
    %v95 = vlaneseq
    %v96 = vshrl.u32 %v95, 7
    %v97 = vsub.s32 0, %v96
    %v98 = vrot.slane %v93, %v97
    %v99 = vlaneseq
    %v100 = vshrl.u32 %v99, 7
    %v101 = vsub.s32 1, %v100
    %v102 = vrot.slane %v93, %v101
    %v103 = vlaneseq
    %v104 = vshrl.u32 %v103, 7
    %v105 = vsub.s32 2, %v104
    %v106 = vrot.slane %v93, %v105
    %v107 = vlaneseq
    %v108 = vshrl.u32 %v107, 7
    %v109 = vsub.s32 3, %v108
    %v110 = vrot.slane %v93, %v109
    %vm115 = vcmask 138240
    %v117 = vsel %vm115, %v80, 0
    %vm119 = vcmask 1040384
    %v121 = vsel %vm119, %v89, 0
    %v124 = vsel %vm119, %v90, 0
    %v127 = vsel %vm119, %v91, 0
    %v130 = vsel %vm119, %v92, 0
    %132 = vmatprep.subr.mxu0 %v82
    %133 = vmatpush1.msra.mxu0 %v81
    %134 = vmatprep.subr.mxu0 %v86
    %135 = vmatpush1.msra.mxu0 %v85
    %136 = vmatprep.subr.mxu0 %v124
    %137 = vmatpush1.msra.mxu0 %v121
    %138 = vmatprep.subr.mxu0 0.0
    %139 = vmatpush1.msra.mxu0 0.0
    %140 = vmatprep.subr.mxu0 0.0
    %141 = vmatpush1.msra.mxu0 0.0
    %142 = vmatprep.subr.mxu0 0.0
    %143 = vmatpush1.msra.mxu0 0.0
    %144 = vmatprep.subr.mxu0 0.0
    %145 = vmatpush1.msra.mxu0 0.0
    %146 = vmatprep.subr.mxu0 0.0
    %147 = vmatpush1.msra.mxu0 0.0
    %148 = vmatprep.subr.mxu0 0.0
    %149 = vmatpush1.msra.mxu0 0.0
    %150 = vmatprep.subr.mxu0 0.0
    %151 = vmatpush1.msra.mxu0 0.0
    %152 = vmatprep.subr.mxu0 0.0
    %153 = vmatpush1.msra.mxu0 0.0
    %154 = vmatprep.subr.mxu0 0.0
    %155 = vmatpush1.msra.mxu0 0.0
    %156 = vmatprep.subr.mxu0 0.0
    %157 = vmatpush1.msra.mxu0 0.0
    %158 = vmatprep.subr.mxu0 0.0
    %159 = vmatpush1.msra.mxu0 0.0
    %160 = vmatprep.subr.mxu0 0.0
    %161 = vmatpush1.msra.mxu0 0.0
    %162 = vmatprep.subr.mxu0 0.0
    %163 = vmatpush1.msra.mxu0 0.0
    %164 = vmatprep.subr.mxu0 0.0
    %165 = vmatpush1.msra.mxu0 0.0
    %166 = vmatprep.subr.mxu0 0.0
    %167 = vmatpush1.msra.mxu0 0.0
    %168 = vmatprep.subr.mxu0 0.0
    %169 = vmatpush1.msra.mxu0 0.0
    %170 = vmatprep.subr.mxu0 0.0
    %171 = vmatpush1.msra.mxu0 0.0
    %172 = vmatprep.subr.mxu0 0.0
    %173 = vmatpush1.msra.mxu0 0.0
    %174 = vmatprep.subr.mxu0 0.0
    %175 = vmatpush1.msra.mxu0 0.0
    %176 = vmatprep.subr.mxu0 0.0
    %177 = vmatpush1.msra.mxu0 0.0
    %178 = vmatprep.subr.mxu0 0.0
    %179 = vmatpush1.msra.mxu0 0.0
    %180 = vmatprep.subr.mxu0 0.0
    %181 = vmatpush1.msra.mxu0 0.0
    %182 = vmatprep.subr.mxu0 0.0
    %183 = vmatpush1.msra.mxu0 0.0
    %184 = vmatprep.subr.mxu0 0.0
    %185 = vmatpush1.msra.mxu0 0.0
    %186 = vmatprep.subr.mxu0 0.0
    %187 = vmatpush1.msra.mxu0 0.0
    %188 = vmatprep.subr.mxu0 0.0
    %189 = vmatpush1.msra.mxu0 0.0
    %190 = vmatprep.subr.mxu0 0.0
    %191 = vmatpush1.msra.mxu0 0.0
    %192 = vmatprep.subr.mxu0 0.0
    %193 = vmatpush1.msra.mxu0 0.0
    %194 = vmatprep.subr.mxu0 0.0
    %195 = vmatpush1.msra.mxu0 0.0
    %196 = vmatprep.mubr.f32.mxu0 0.0
    %197 = vmatmul.mubr.f32.gmra.mrb[0].mxu0 %v117
    %v198 = vpop.f32.mrb[0].mxu0
    %v199 = vadd.f32 %v98, %v198
    %v200 = vpop.f32.mrb[0].mxu0
    %v201 = vadd.f32 %v102, %v200
    %202 = vdwg.mxu0
    %203 = vmatprep.subr.mxu0 %v84
    %204 = vmatpush1.msra.mxu0 %v83
    %205 = vmatprep.subr.mxu0 %v88
    %206 = vmatpush1.msra.mxu0 %v87
    %207 = vmatprep.subr.mxu0 %v130
    %208 = vmatpush1.msra.mxu0 %v127
    %209 = vmatprep.subr.mxu0 0.0
    %210 = vmatpush1.msra.mxu0 0.0
    %211 = vmatprep.subr.mxu0 0.0
    %212 = vmatpush1.msra.mxu0 0.0
    %213 = vmatprep.subr.mxu0 0.0
    %214 = vmatpush1.msra.mxu0 0.0
    %215 = vmatprep.subr.mxu0 0.0
    %216 = vmatpush1.msra.mxu0 0.0
    %217 = vmatprep.subr.mxu0 0.0
    %218 = vmatpush1.msra.mxu0 0.0
    %219 = vmatprep.subr.mxu0 0.0
    %220 = vmatpush1.msra.mxu0 0.0
    %221 = vmatprep.subr.mxu0 0.0
    %222 = vmatpush1.msra.mxu0 0.0
    %223 = vmatprep.subr.mxu0 0.0
    %224 = vmatpush1.msra.mxu0 0.0
    %225 = vmatprep.subr.mxu0 0.0
    %226 = vmatpush1.msra.mxu0 0.0
    %227 = vmatprep.subr.mxu0 0.0
    %228 = vmatpush1.msra.mxu0 0.0
    %229 = vmatprep.subr.mxu0 0.0
    %230 = vmatpush1.msra.mxu0 0.0
    %231 = vmatprep.subr.mxu0 0.0
    %232 = vmatpush1.msra.mxu0 0.0
    %233 = vmatprep.subr.mxu0 0.0
    %234 = vmatpush1.msra.mxu0 0.0
    %235 = vmatprep.subr.mxu0 0.0
    %236 = vmatpush1.msra.mxu0 0.0
    %237 = vmatprep.subr.mxu0 0.0
    %238 = vmatpush1.msra.mxu0 0.0
    %239 = vmatprep.subr.mxu0 0.0
    %240 = vmatpush1.msra.mxu0 0.0
    %241 = vmatprep.subr.mxu0 0.0
    %242 = vmatpush1.msra.mxu0 0.0
    %243 = vmatprep.subr.mxu0 0.0
    %244 = vmatpush1.msra.mxu0 0.0
    %245 = vmatprep.subr.mxu0 0.0
    %246 = vmatpush1.msra.mxu0 0.0
    %247 = vmatprep.subr.mxu0 0.0
    %248 = vmatpush1.msra.mxu0 0.0
    %249 = vmatprep.subr.mxu0 0.0
    %250 = vmatpush1.msra.mxu0 0.0
    %251 = vmatprep.subr.mxu0 0.0
    %252 = vmatpush1.msra.mxu0 0.0
    %253 = vmatprep.subr.mxu0 0.0
    %254 = vmatpush1.msra.mxu0 0.0
    %255 = vmatprep.subr.mxu0 0.0
    %256 = vmatpush1.msra.mxu0 0.0
    %257 = vmatprep.subr.mxu0 0.0
    %258 = vmatpush1.msra.mxu0 0.0
    %259 = vmatprep.subr.mxu0 0.0
    %260 = vmatpush1.msra.mxu0 0.0
    %261 = vmatprep.subr.mxu0 0.0
    %262 = vmatpush1.msra.mxu0 0.0
    %263 = vmatprep.subr.mxu0 0.0
    %264 = vmatpush1.msra.mxu0 0.0
    %265 = vmatprep.subr.mxu0 0.0
    %266 = vmatpush1.msra.mxu0 0.0
    %267 = vmatprep.mubr.f32.mxu0 0.0
    %268 = vmatmul.mubr.f32.gmra.mrb[0].mxu0 %v117
    %v269 = vpop.f32.mrb[0].mxu0
    %v270 = vadd.f32 %v106, %v269
    %v271 = vpop.f32.mrb[0].mxu0
    %v272 = vadd.f32 %v110, %v271
    %273 = vdwg.mxu0
    %v274 = vtanh.pop %v199
    %v275 = vtanh.pop %v201
    %v276 = vtanh.pop %v270
    %v277 = vtanh.pop %v272
    %v278 = vld [vmem:[#allocation7] sm:$0xff]
    %v279 = vld [vmem:[#allocation7 + $0x8] sm:$0xff]
    %v280 = vld [vmem:[#allocation7 + $0x10] sm:$0xff]
    %v281 = vld [vmem:[#allocation7 + $0x18] sm:$0xff]
    %v282 = vld [vmem:[#allocation7 + $0x20] sm:$0xff]
    %v283 = vld [vmem:[#allocation7 + $0x28] sm:$0xff]
    %v284 = vld [vmem:[#allocation7 + $0x30] sm:$0xff]
    %v285 = vld [vmem:[#allocation7 + $0x38] sm:$0xff]
    %v286 = vld [vmem:[#allocation7 + $0x40] sm:$0xff]
    %v287 = vld [vmem:[#allocation7 + $0x48] sm:$0xff]
    %v288 = vld [vmem:[#allocation7 + $0x50] sm:$0xff]
    %v289 = vld [vmem:[#allocation7 + $0x58] sm:$0xff]
    %v290 = vld [vmem:[#allocation7 + $0x60] sm:$0xff]
    %v291 = vld [vmem:[#allocation7 + $0x68] sm:$0xff]
    %v292 = vld [vmem:[#allocation7 + $0x70] sm:$0xff]
    %v293 = vld [vmem:[#allocation7 + $0x78] sm:$0xff]
    %v294 = vld [vmem:[#allocation7 + $0x80] sm:$0xff]
    %v295 = vld [vmem:[#allocation7 + $0x88] sm:$0xff]
    %v296 = vld [vmem:[#allocation7 + $0x90] sm:$0xff]
    %v297 = vld [vmem:[#allocation7 + $0x98] sm:$0xff]
    %v298 = vld [vmem:[#allocation7 + $0xa0] sm:$0xff]
    %v299 = vld [vmem:[#allocation7 + $0xa8] sm:$0xff]
    %v300 = vld [vmem:[#allocation7 + $0xb0] sm:$0xff]
    %v301 = vld [vmem:[#allocation7 + $0xb8] sm:$0xff]
    %v302 = vld [vmem:[#allocation7 + $0xc0] sm:$0xff]
    %v303 = vld [vmem:[#allocation7 + $0xc8] sm:$0xff]
    %v304 = vld [vmem:[#allocation7 + $0xd0] sm:$0xff]
    %v305 = vld [vmem:[#allocation7 + $0xd8] sm:$0xff]
    %v306 = vld [vmem:[#allocation7 + $0xe0] sm:$0xff]
    %v307 = vld [vmem:[#allocation7 + $0xe8] sm:$0xff]
    %v308 = vld [vmem:[#allocation7 + $0xf0] sm:$0xff]
    %v309 = vld [vmem:[#allocation7 + $0xf8] sm:$0xff]
    %v310 = vld [vmem:[#allocation7 + $0x100] sm:$0xff]
    %v311 = vld [vmem:[#allocation7 + $0x108] sm:$0xff]
    %v312 = vld [vmem:[#allocation7 + $0x110] sm:$0xff]
    %v313 = vld [vmem:[#allocation7 + $0x118] sm:$0xff]
    %v314 = vld [vmem:[#allocation7 + $0x120] sm:$0xff]
    %v315 = vld [vmem:[#allocation7 + $0x128] sm:$0xff]
    %v316 = vld [vmem:[#allocation7 + $0x130] sm:$0xff]
    %v317 = vld [vmem:[#allocation7 + $0x138] sm:$0xff]
    %v318 = vld [vmem:[#allocation7 + $0x140] sm:$0xff]
    %v319 = vld [vmem:[#allocation7 + $0x148] sm:$0xff]
    %v320 = vld [vmem:[#allocation7 + $0x150] sm:$0xff]
    %v321 = vld [vmem:[#allocation7 + $0x158] sm:$0xff]
    %v322 = vld [vmem:[#allocation7 + $0x160] sm:$0xff]
    %v323 = vld [vmem:[#allocation7 + $0x168] sm:$0xff]
    %v324 = vld [vmem:[#allocation7 + $0x170] sm:$0xff]
    %v325 = vld [vmem:[#allocation7 + $0x178] sm:$0xff]
    %v326 = vld [vmem:[#allocation7 + $0x180] sm:$0xff]
    %v327 = vld [vmem:[#allocation7 + $0x188] sm:$0xff]
    %v328 = vld [vmem:[#allocation7 + $0x190] sm:$0xff]
    %v329 = vld [vmem:[#allocation7 + $0x198] sm:$0xff]
    %v330 = vld [vmem:[#allocation7 + $0x1a0] sm:$0xff]
    %v331 = vld [vmem:[#allocation7 + $0x1a8] sm:$0xff]
    %v332 = vld [vmem:[#allocation7 + $0x1b0] sm:$0xff]
    %v333 = vld [vmem:[#allocation7 + $0x1b8] sm:$0xff]
    %v334 = vld [vmem:[#allocation7 + $0x1c0] sm:$0xff]
    %v335 = vld [vmem:[#allocation7 + $0x1c8] sm:$0xff]
    %v336 = vld [vmem:[#allocation7 + $0x1d0] sm:$0xff]
    %v337 = vld [vmem:[#allocation7 + $0x1d8] sm:$0xff]
    %v338 = vld [vmem:[#allocation7 + $0x1e0] sm:$0xff]
    %v339 = vld [vmem:[#allocation7 + $0x1e8] sm:$0xff]
    %v340 = vld [vmem:[#allocation7 + $0x1f0] sm:$0xff]
    %v341 = vld [vmem:[#allocation7 + $0x1f8] sm:$0xff]
    %v342 = vld [vmem:[#allocation7 + $0x200] sm:$0xff]
    %v343 = vld [vmem:[#allocation7 + $0x208] sm:$0xff]
    %v344 = vld [vmem:[#allocation7 + $0x210] sm:$0xff]
    %v345 = vld [vmem:[#allocation7 + $0x218] sm:$0xff]
    %v346 = vld [vmem:[#allocation7 + $0x220] sm:$0xff]
    %v347 = vld [vmem:[#allocation7 + $0x228] sm:$0xff]
    %v348 = vld [vmem:[#allocation7 + $0x230] sm:$0xff]
    %v349 = vld [vmem:[#allocation7 + $0x238] sm:$0xff]
    %v350 = vld [vmem:[#allocation7 + $0x240] sm:$0xff]
    %v351 = vld [vmem:[#allocation7 + $0x248] sm:$0xff]
    %v352 = vld [vmem:[#allocation7 + $0x250] sm:$0xff]
    %v353 = vld [vmem:[#allocation7 + $0x258] sm:$0xff]
    %v354 = vld [vmem:[#allocation7 + $0x260] sm:$0xff]
    %v355 = vld [vmem:[#allocation7 + $0x268] sm:$0xff]
    %v356 = vld [vmem:[#allocation7 + $0x270] sm:$0xff]
    %v357 = vld [vmem:[#allocation7 + $0x278] sm:$0xff]
    %v358 = vld [vmem:[#allocation7 + $0x280] sm:$0xff]
    %v359 = vld [vmem:[#allocation7 + $0x288] sm:$0xff]
    %v360 = vld [vmem:[#allocation7 + $0x290] sm:$0xff]
    %v361 = vld [vmem:[#allocation7 + $0x298] sm:$0xff]
    %v362 = vld [vmem:[#allocation7 + $0x2a0] sm:$0xff]
    %v363 = vld [vmem:[#allocation7 + $0x2a8] sm:$0xff]
    %v364 = vld [vmem:[#allocation7 + $0x2b0] sm:$0xff]
    %v365 = vld [vmem:[#allocation7 + $0x2b8] sm:$0xff]
    %v366 = vld [vmem:[#allocation7 + $0x2c0] sm:$0xff]
    %v367 = vld [vmem:[#allocation7 + $0x2c8] sm:$0xff]
    %v368 = vld [vmem:[#allocation7 + $0x2d0] sm:$0xff]
    %v369 = vld [vmem:[#allocation7 + $0x2d8] sm:$0xff]
    %v370 = vld [vmem:[#allocation7 + $0x2e0] sm:$0xff]
    %v371 = vld [vmem:[#allocation7 + $0x2e8] sm:$0xff]
    %v372 = vld [vmem:[#allocation7 + $0x2f0] sm:$0xff]
    %v373 = vld [vmem:[#allocation7 + $0x2f8] sm:$0xff]
    %v374 = vld [vmem:[#allocation7 + $0x300] sm:$0xff]
    %v375 = vld [vmem:[#allocation7 + $0x308] sm:$0xff]
    %v376 = vld [vmem:[#allocation7 + $0x310] sm:$0xff]
    %v377 = vld [vmem:[#allocation7 + $0x318] sm:$0xff]
    %v378 = vld [vmem:[#allocation7 + $0x320] sm:$0xff]
    %v379 = vld [vmem:[#allocation7 + $0x328] sm:$0xff]
    %v380 = vld [vmem:[#allocation7 + $0x330] sm:$0xff]
    %v381 = vld [vmem:[#allocation7 + $0x338] sm:$0xff]
    %v382 = vld [vmem:[#allocation7 + $0x340] sm:$0xff]
    %v383 = vld [vmem:[#allocation7 + $0x348] sm:$0xff]
    %v384 = vld [vmem:[#allocation7 + $0x350] sm:$0xff]
    %v385 = vld [vmem:[#allocation7 + $0x358] sm:$0xff]
    %v386 = vld [vmem:[#allocation7 + $0x360] sm:$0xff]
    %v387 = vld [vmem:[#allocation7 + $0x368] sm:$0xff]
    %v388 = vld [vmem:[#allocation7 + $0x370] sm:$0xff]
    %v389 = vld [vmem:[#allocation7 + $0x378] sm:$0xff]
    %v390 = vld [vmem:[#allocation7 + $0x380] sm:$0xff]
    %v391 = vld [vmem:[#allocation7 + $0x388] sm:$0xff]
    %v392 = vld [vmem:[#allocation7 + $0x390] sm:$0xff]
    %v393 = vld [vmem:[#allocation7 + $0x398] sm:$0xff]
    %v394 = vld [vmem:[#allocation7 + $0x3a0] sm:$0xff]
    %v395 = vld [vmem:[#allocation7 + $0x3a8] sm:$0xff]
    %v396 = vld [vmem:[#allocation7 + $0x3b0] sm:$0xff]
    %v397 = vld [vmem:[#allocation7 + $0x3b8] sm:$0xff]
    %v398 = vld [vmem:[#allocation7 + $0x3c0] sm:$0xff]
    %v399 = vld [vmem:[#allocation7 + $0x3c8] sm:$0xff]
    %v400 = vld [vmem:[#allocation7 + $0x3d0] sm:$0xff]
    %v401 = vld [vmem:[#allocation7 + $0x3d8] sm:$0xff]
    %v402 = vld [vmem:[#allocation7 + $0x3e0] sm:$0xff]
    %v403 = vld [vmem:[#allocation7 + $0x3e8] sm:$0xff]
    %v404 = vld [vmem:[#allocation7 + $0x3f0] sm:$0xff]
    %v405 = vld [vmem:[#allocation7 + $0x3f8] sm:$0xff]
    %v406 = vld [vmem:[#allocation7 + $0x400] sm:$0xff]
    %v407 = vld [vmem:[#allocation7 + $0x408] sm:$0xff]
    %v408 = vld [vmem:[#allocation7 + $0x410] sm:$0xff]
    %v409 = vld [vmem:[#allocation7 + $0x418] sm:$0xff]
    %v410 = vld [vmem:[#allocation7 + $0x420] sm:$0xff]
    %v411 = vld [vmem:[#allocation7 + $0x428] sm:$0xff]
    %v412 = vld [vmem:[#allocation7 + $0x430] sm:$0xff]
    %v413 = vld [vmem:[#allocation7 + $0x438] sm:$0xff]
    %v414 = vld [vmem:[#allocation7 + $0x440] sm:$0xff]
    %v415 = vld [vmem:[#allocation7 + $0x448] sm:$0xff]
    %v416 = vld [vmem:[#allocation7 + $0x450] sm:$0xff]
    %v417 = vld [vmem:[#allocation7 + $0x458] sm:$0xff]
    %v418 = vld [vmem:[#allocation7 + $0x460] sm:$0xff]
    %v419 = vld [vmem:[#allocation7 + $0x468] sm:$0xff]
    %v420 = vld [vmem:[#allocation7 + $0x470] sm:$0xff]
    %v421 = vld [vmem:[#allocation7 + $0x478] sm:$0xff]
    %v422 = vld [vmem:[#allocation7 + $0x480] sm:$0xff]
    %v423 = vld [vmem:[#allocation7 + $0x488] sm:$0xff]
    %v424 = vld [vmem:[#allocation7 + $0x490] sm:$0xff]
    %v425 = vld [vmem:[#allocation7 + $0x498] sm:$0xff]
    %v426 = vld [vmem:[#allocation7 + $0x4a0] sm:$0xff]
    %v427 = vld [vmem:[#allocation7 + $0x4a8] sm:$0xff]
    %v428 = vld [vmem:[#allocation7 + $0x4b0] sm:$0xff]
    %v429 = vld [vmem:[#allocation7 + $0x4b8] sm:$0xff]
    %v430 = vld [vmem:[#allocation7 + $0x4c0] sm:$0xff]
    %v431 = vld [vmem:[#allocation7 + $0x4c8] sm:$0xff]
    %v432 = vld [vmem:[#allocation7 + $0x4d0] sm:$0xff]
    %v433 = vld [vmem:[#allocation7 + $0x4d8] sm:$0xff]
    %v434 = vld [vmem:[#allocation7 + $0x4e0] sm:$0xff]
    %v435 = vld [vmem:[#allocation7 + $0x4e8] sm:$0xff]
    %v436 = vld [vmem:[#allocation7 + $0x4f0] sm:$0xff]
    %v437 = vld [vmem:[#allocation7 + $0x4f8] sm:$0xff]
    %v438 = vld [vmem:[#allocation7 + $0x500] sm:$0xff]
    %v439 = vld [vmem:[#allocation7 + $0x508] sm:$0xff]
    %v440 = vld [vmem:[#allocation7 + $0x510] sm:$0xff]
    %v441 = vld [vmem:[#allocation7 + $0x518] sm:$0xff]
    %v442 = vld [vmem:[#allocation7 + $0x520] sm:$0xff]
    %v443 = vld [vmem:[#allocation7 + $0x528] sm:$0xff]
    %v444 = vld [vmem:[#allocation7 + $0x530] sm:$0xff]
    %v445 = vld [vmem:[#allocation7 + $0x538] sm:$0xff]
    %v446 = vld [vmem:[#allocation7 + $0x540] sm:$0xff]
    %v447 = vld [vmem:[#allocation7 + $0x548] sm:$0xff]
    %v448 = vld [vmem:[#allocation7 + $0x550] sm:$0xff]
    %v449 = vld [vmem:[#allocation7 + $0x558] sm:$0xff]
    %v450 = vld [vmem:[#allocation7 + $0x560] sm:$0xff]
    %v451 = vld [vmem:[#allocation7 + $0x568] sm:$0xff]
    %v452 = vld [vmem:[#allocation7 + $0x570] sm:$0xff]
    %v453 = vld [vmem:[#allocation7 + $0x578] sm:$0xff]
    %v454 = vld [vmem:[#allocation7 + $0x580] sm:$0xff]
    %v455 = vld [vmem:[#allocation7 + $0x588] sm:$0xff]
    %v456 = vld [vmem:[#allocation7 + $0x590] sm:$0xff]
    %v457 = vld [vmem:[#allocation7 + $0x598] sm:$0xff]
    %v458 = vld [vmem:[#allocation7 + $0x5a0] sm:$0xff]
    %v459 = vld [vmem:[#allocation7 + $0x5a8] sm:$0xff]
    %v460 = vld [vmem:[#allocation7 + $0x5b0] sm:$0xff]
    %v461 = vld [vmem:[#allocation7 + $0x5b8] sm:$0xff]
    %v462 = vld [vmem:[#allocation7 + $0x5c0] sm:$0xff]
    %v463 = vld [vmem:[#allocation7 + $0x5c8] sm:$0xff]
    %v464 = vld [vmem:[#allocation7 + $0x5d0] sm:$0xff]
    %v465 = vld [vmem:[#allocation7 + $0x5d8] sm:$0xff]
    %v466 = vld [vmem:[#allocation7 + $0x5e0] sm:$0xff]
    %v467 = vld [vmem:[#allocation7 + $0x5e8] sm:$0xff]
    %v468 = vld [vmem:[#allocation7 + $0x5f0] sm:$0xff]
    %v469 = vld [vmem:[#allocation7 + $0x5f8] sm:$0xff]
    %v470 = vld [vmem:[%s4] sm:$0x7]
    %v472 = vlaneseq
    %v473 = vshrl.u32 %v472, 7
    %v474 = vsub.s32 0, %v473
    %v475 = vrot.slane %v470, %v474
    %v476 = vlaneseq
    %v477 = vshrl.u32 %v476, 7
    %v478 = vsub.s32 1, %v477
    %v479 = vrot.slane %v470, %v478
    %v480 = vlaneseq
    %v481 = vshrl.u32 %v480, 7
    %v482 = vsub.s32 2, %v481
    %v483 = vrot.slane %v470, %v482
    %487 = vmatprep.subr.mxu0 %v279
    %488 = vmatpush1.msra.mxu0 %v278
    %489 = vmatprep.subr.mxu0 %v282
    %490 = vmatpush1.msra.mxu0 %v281
    %491 = vmatprep.subr.mxu0 %v285
    %492 = vmatpush1.msra.mxu0 %v284
    %493 = vmatprep.subr.mxu0 %v288
    %494 = vmatpush1.msra.mxu0 %v287
    %495 = vmatprep.subr.mxu0 %v291
    %496 = vmatpush1.msra.mxu0 %v290
    %497 = vmatprep.subr.mxu0 %v294
    %498 = vmatpush1.msra.mxu0 %v293
    %499 = vmatprep.subr.mxu0 %v297
    %500 = vmatpush1.msra.mxu0 %v296
    %501 = vmatprep.subr.mxu0 %v300
    %502 = vmatpush1.msra.mxu0 %v299
    %503 = vmatprep.subr.mxu0 %v303
    %504 = vmatpush1.msra.mxu0 %v302
    %505 = vmatprep.subr.mxu0 %v306
    %506 = vmatpush1.msra.mxu0 %v305
    %507 = vmatprep.subr.mxu0 %v309
    %508 = vmatpush1.msra.mxu0 %v308
    %509 = vmatprep.subr.mxu0 %v312
    %510 = vmatpush1.msra.mxu0 %v311
    %511 = vmatprep.subr.mxu0 %v315
    %512 = vmatpush1.msra.mxu0 %v314
    %513 = vmatprep.subr.mxu0 %v318
    %514 = vmatpush1.msra.mxu0 %v317
    %515 = vmatprep.subr.mxu0 %v321
    %516 = vmatpush1.msra.mxu0 %v320
    %517 = vmatprep.subr.mxu0 %v324
    %518 = vmatpush1.msra.mxu0 %v323
    %519 = vmatprep.subr.mxu0 %v327
    %520 = vmatpush1.msra.mxu0 %v326
    %521 = vmatprep.subr.mxu0 %v330
    %522 = vmatpush1.msra.mxu0 %v329
    %523 = vmatprep.subr.mxu0 %v333
    %524 = vmatpush1.msra.mxu0 %v332
    %525 = vmatprep.subr.mxu0 %v336
    %526 = vmatpush1.msra.mxu0 %v335
    %527 = vmatprep.subr.mxu0 %v339
    %528 = vmatpush1.msra.mxu0 %v338
    %529 = vmatprep.subr.mxu0 %v342
    %530 = vmatpush1.msra.mxu0 %v341
    %531 = vmatprep.subr.mxu0 %v345
    %532 = vmatpush1.msra.mxu0 %v344
    %533 = vmatprep.subr.mxu0 %v348
    %534 = vmatpush1.msra.mxu0 %v347
    %535 = vmatprep.subr.mxu0 %v351
    %536 = vmatpush1.msra.mxu0 %v350
    %537 = vmatprep.subr.mxu0 %v354
    %538 = vmatpush1.msra.mxu0 %v353
    %539 = vmatprep.subr.mxu0 %v357
    %540 = vmatpush1.msra.mxu0 %v356
    %541 = vmatprep.subr.mxu0 %v360
    %542 = vmatpush1.msra.mxu0 %v359
    %543 = vmatprep.subr.mxu0 %v363
    %544 = vmatpush1.msra.mxu0 %v362
    %545 = vmatprep.subr.mxu0 %v366
    %546 = vmatpush1.msra.mxu0 %v365
    %547 = vmatprep.subr.mxu0 %v369
    %548 = vmatpush1.msra.mxu0 %v368
    %549 = vmatprep.subr.mxu0 %v372
    %550 = vmatpush1.msra.mxu0 %v371
    %551 = vmatprep.mubr.f32.mxu0 %v275
    %552 = vmatmul.mubr.f32.gmra.mrb[0].mxu0 %v274
    %v553 = vpop.f32.mrb[0].mxu0
    %v554 = vadd.f32 %v475, %v553
    %v555 = vpop.f32.mrb[0].mxu0
    %v556 = vadd.f32 %v479, %v555
    %557 = vdwg.mxu0
    %558 = vmatprep.subr.mxu0 %v375
    %559 = vmatpush1.msra.mxu0 %v374
    %560 = vmatprep.subr.mxu0 %v378
    %561 = vmatpush1.msra.mxu0 %v377
    %562 = vmatprep.subr.mxu0 %v381
    %563 = vmatpush1.msra.mxu0 %v380
    %564 = vmatprep.subr.mxu0 %v384
    %565 = vmatpush1.msra.mxu0 %v383
    %566 = vmatprep.subr.mxu0 %v387
    %567 = vmatpush1.msra.mxu0 %v386
    %568 = vmatprep.subr.mxu0 %v390
    %569 = vmatpush1.msra.mxu0 %v389
    %570 = vmatprep.subr.mxu0 %v393
    %571 = vmatpush1.msra.mxu0 %v392
    %572 = vmatprep.subr.mxu0 %v396
    %573 = vmatpush1.msra.mxu0 %v395
    %574 = vmatprep.subr.mxu0 %v399
    %575 = vmatpush1.msra.mxu0 %v398
    %576 = vmatprep.subr.mxu0 %v402
    %577 = vmatpush1.msra.mxu0 %v401
    %578 = vmatprep.subr.mxu0 %v405
    %579 = vmatpush1.msra.mxu0 %v404
    %580 = vmatprep.subr.mxu0 %v408
    %581 = vmatpush1.msra.mxu0 %v407
    %582 = vmatprep.subr.mxu0 %v411
    %583 = vmatpush1.msra.mxu0 %v410
    %584 = vmatprep.subr.mxu0 %v414
    %585 = vmatpush1.msra.mxu0 %v413
    %586 = vmatprep.subr.mxu0 %v417
    %587 = vmatpush1.msra.mxu0 %v416
    %588 = vmatprep.subr.mxu0 %v420
    %589 = vmatpush1.msra.mxu0 %v419
    %590 = vmatprep.subr.mxu0 %v423
    %591 = vmatpush1.msra.mxu0 %v422
    %592 = vmatprep.subr.mxu0 %v426
    %593 = vmatpush1.msra.mxu0 %v425
    %594 = vmatprep.subr.mxu0 %v429
    %595 = vmatpush1.msra.mxu0 %v428
    %596 = vmatprep.subr.mxu0 %v432
    %597 = vmatpush1.msra.mxu0 %v431
    %598 = vmatprep.subr.mxu0 %v435
    %599 = vmatpush1.msra.mxu0 %v434
    %600 = vmatprep.subr.mxu0 %v438
    %601 = vmatpush1.msra.mxu0 %v437
    %602 = vmatprep.subr.mxu0 %v441
    %603 = vmatpush1.msra.mxu0 %v440
    %604 = vmatprep.subr.mxu0 %v444
    %605 = vmatpush1.msra.mxu0 %v443
    %606 = vmatprep.subr.mxu0 %v447
    %607 = vmatpush1.msra.mxu0 %v446
    %608 = vmatprep.subr.mxu0 %v450
    %609 = vmatpush1.msra.mxu0 %v449
    %610 = vmatprep.subr.mxu0 %v453
    %611 = vmatpush1.msra.mxu0 %v452
    %612 = vmatprep.subr.mxu0 %v456
    %613 = vmatpush1.msra.mxu0 %v455
    %614 = vmatprep.subr.mxu0 %v459
    %615 = vmatpush1.msra.mxu0 %v458
    %616 = vmatprep.subr.mxu0 %v462
    %617 = vmatpush1.msra.mxu0 %v461
    %618 = vmatprep.subr.mxu0 %v465
    %619 = vmatpush1.msra.mxu0 %v464
    %620 = vmatprep.subr.mxu0 %v468
    %621 = vmatpush1.msra.mxu0 %v467
    %622 = vmatprep.mubr.f32.mxu0 %v277
    %623 = vmatmul.mubr.f32.gmra.mrb[0].mxu0 %v276
    %v624 = vpop.f32.mrb[0].mxu0
    %v625 = vadd.f32 %v554, %v624
    %v626 = vpop.f32.mrb[0].mxu0
    %v627 = vadd.f32 %v556, %v626
    %628 = vdwg.mxu0
    %629 = vmatprep.subr.mxu0 0.0
    %630 = vmatpush1.msra.mxu0 %v280
    %631 = vmatprep.subr.mxu0 0.0
    %632 = vmatpush1.msra.mxu0 %v283
    %633 = vmatprep.subr.mxu0 0.0
    %634 = vmatpush1.msra.mxu0 %v286
    %635 = vmatprep.subr.mxu0 0.0
    %636 = vmatpush1.msra.mxu0 %v289
    %637 = vmatprep.subr.mxu0 0.0
    %638 = vmatpush1.msra.mxu0 %v292
    %639 = vmatprep.subr.mxu0 0.0
    %640 = vmatpush1.msra.mxu0 %v295
    %641 = vmatprep.subr.mxu0 0.0
    %642 = vmatpush1.msra.mxu0 %v298
    %643 = vmatprep.subr.mxu0 0.0
    %644 = vmatpush1.msra.mxu0 %v301
    %645 = vmatprep.subr.mxu0 0.0
    %646 = vmatpush1.msra.mxu0 %v304
    %647 = vmatprep.subr.mxu0 0.0
    %648 = vmatpush1.msra.mxu0 %v307
    %649 = vmatprep.subr.mxu0 0.0
    %650 = vmatpush1.msra.mxu0 %v310
    %651 = vmatprep.subr.mxu0 0.0
    %652 = vmatpush1.msra.mxu0 %v313
    %653 = vmatprep.subr.mxu0 0.0
    %654 = vmatpush1.msra.mxu0 %v316
    %655 = vmatprep.subr.mxu0 0.0
    %656 = vmatpush1.msra.mxu0 %v319
    %657 = vmatprep.subr.mxu0 0.0
    %658 = vmatpush1.msra.mxu0 %v322
    %659 = vmatprep.subr.mxu0 0.0
    %660 = vmatpush1.msra.mxu0 %v325
    %661 = vmatprep.subr.mxu0 0.0
    %662 = vmatpush1.msra.mxu0 %v328
    %663 = vmatprep.subr.mxu0 0.0
    %664 = vmatpush1.msra.mxu0 %v331
    %665 = vmatprep.subr.mxu0 0.0
    %666 = vmatpush1.msra.mxu0 %v334
    %667 = vmatprep.subr.mxu0 0.0
    %668 = vmatpush1.msra.mxu0 %v337
    %669 = vmatprep.subr.mxu0 0.0
    %670 = vmatpush1.msra.mxu0 %v340
    %671 = vmatprep.subr.mxu0 0.0
    %672 = vmatpush1.msra.mxu0 %v343
    %673 = vmatprep.subr.mxu0 0.0
    %674 = vmatpush1.msra.mxu0 %v346
    %675 = vmatprep.subr.mxu0 0.0
    %676 = vmatpush1.msra.mxu0 %v349
    %677 = vmatprep.subr.mxu0 0.0
    %678 = vmatpush1.msra.mxu0 %v352
    %679 = vmatprep.subr.mxu0 0.0
    %680 = vmatpush1.msra.mxu0 %v355
    %681 = vmatprep.subr.mxu0 0.0
    %682 = vmatpush1.msra.mxu0 %v358
    %683 = vmatprep.subr.mxu0 0.0
    %684 = vmatpush1.msra.mxu0 %v361
    %685 = vmatprep.subr.mxu0 0.0
    %686 = vmatpush1.msra.mxu0 %v364
    %687 = vmatprep.subr.mxu0 0.0
    %688 = vmatpush1.msra.mxu0 %v367
    %689 = vmatprep.subr.mxu0 0.0
    %690 = vmatpush1.msra.mxu0 %v370
    %691 = vmatprep.subr.mxu0 0.0
    %692 = vmatpush1.msra.mxu0 %v373
    %693 = vmatprep.mubr.f32.mxu0 %v275
    %694 = vmatmul.mubr.f32.gmra.mrb[0].mxu0 %v274
    %v695 = vpop.f32.mrb[0].mxu0
    %v696 = vadd.f32 %v483, %v695
    %v697 = vpop.f32.mrb[0].mxu0
    %698 = vdwg.mxu0
    %699 = vmatprep.subr.mxu0 0.0
    %700 = vmatpush1.msra.mxu0 %v376
    %701 = vmatprep.subr.mxu0 0.0
    %702 = vmatpush1.msra.mxu0 %v379
    %703 = vmatprep.subr.mxu0 0.0
    %704 = vmatpush1.msra.mxu0 %v382
    %705 = vmatprep.subr.mxu0 0.0
    %706 = vmatpush1.msra.mxu0 %v385
    %707 = vmatprep.subr.mxu0 0.0
    %708 = vmatpush1.msra.mxu0 %v388
    %709 = vmatprep.subr.mxu0 0.0
    %710 = vmatpush1.msra.mxu0 %v391
    %711 = vmatprep.subr.mxu0 0.0
    %712 = vmatpush1.msra.mxu0 %v394
    %713 = vmatprep.subr.mxu0 0.0
    %714 = vmatpush1.msra.mxu0 %v397
    %715 = vmatprep.subr.mxu0 0.0
    %716 = vmatpush1.msra.mxu0 %v400
    %717 = vmatprep.subr.mxu0 0.0
    %718 = vmatpush1.msra.mxu0 %v403
    %719 = vmatprep.subr.mxu0 0.0
    %720 = vmatpush1.msra.mxu0 %v406
    %721 = vmatprep.subr.mxu0 0.0
    %722 = vmatpush1.msra.mxu0 %v409
    %723 = vmatprep.subr.mxu0 0.0
    %724 = vmatpush1.msra.mxu0 %v412
    %725 = vmatprep.subr.mxu0 0.0
    %726 = vmatpush1.msra.mxu0 %v415
    %727 = vmatprep.subr.mxu0 0.0
    %728 = vmatpush1.msra.mxu0 %v418
    %729 = vmatprep.subr.mxu0 0.0
    %730 = vmatpush1.msra.mxu0 %v421
    %731 = vmatprep.subr.mxu0 0.0
    %732 = vmatpush1.msra.mxu0 %v424
    %733 = vmatprep.subr.mxu0 0.0
    %734 = vmatpush1.msra.mxu0 %v427
    %735 = vmatprep.subr.mxu0 0.0
    %736 = vmatpush1.msra.mxu0 %v430
    %737 = vmatprep.subr.mxu0 0.0
    %738 = vmatpush1.msra.mxu0 %v433
    %739 = vmatprep.subr.mxu0 0.0
    %740 = vmatpush1.msra.mxu0 %v436
    %741 = vmatprep.subr.mxu0 0.0
    %742 = vmatpush1.msra.mxu0 %v439
    %743 = vmatprep.subr.mxu0 0.0
    %744 = vmatpush1.msra.mxu0 %v442
    %745 = vmatprep.subr.mxu0 0.0
    %746 = vmatpush1.msra.mxu0 %v445
    %747 = vmatprep.subr.mxu0 0.0
    %748 = vmatpush1.msra.mxu0 %v448
    %749 = vmatprep.subr.mxu0 0.0
    %750 = vmatpush1.msra.mxu0 %v451
    %751 = vmatprep.subr.mxu0 0.0
    %752 = vmatpush1.msra.mxu0 %v454
    %753 = vmatprep.subr.mxu0 0.0
    %754 = vmatpush1.msra.mxu0 %v457
    %755 = vmatprep.subr.mxu0 0.0
    %756 = vmatpush1.msra.mxu0 %v460
    %757 = vmatprep.subr.mxu0 0.0
    %758 = vmatpush1.msra.mxu0 %v463
    %759 = vmatprep.subr.mxu0 0.0
    %760 = vmatpush1.msra.mxu0 %v466
    %761 = vmatprep.subr.mxu0 0.0
    %762 = vmatpush1.msra.mxu0 %v469
    %763 = vmatprep.mubr.f32.mxu0 %v277
    %764 = vmatmul.mubr.f32.gmra.mrb[0].mxu0 %v276
    %v765 = vpop.f32.mrb[0].mxu0
    %v766 = vadd.f32 %v696, %v765
    %v767 = vpop.f32.mrb[0].mxu0
    %768 = vdwg.mxu0
    %v769 = vtanh.pop %v625
    %v770 = vtanh.pop %v627
    %v771 = vtanh.pop %v766
    %v772 = vld [vmem:[#allocation8] sm:$0xff]
    %v773 = vld [vmem:[#allocation8 + $0x8] sm:$0xff]
    %v774 = vld [vmem:[#allocation8 + $0x10] sm:$0xff]
    %v775 = vld [vmem:[#allocation8 + $0x18] sm:$0xff]
    %v776 = vld [vmem:[#allocation8 + $0x20] sm:$0xff]
    %v777 = vld [vmem:[#allocation8 + $0x28] sm:$0xff]
    %v778 = vld [vmem:[#allocation8 + $0x30] sm:$0xff]
    %v779 = vld [vmem:[#allocation8 + $0x38] sm:$0xff]
    %v780 = vld [vmem:[#allocation8 + $0x40] sm:$0xff]
    %v781 = vld [vmem:[#allocation8 + $0x48] sm:$0xff]
    %v782 = vld [vmem:[#allocation8 + $0x50] sm:$0xff]
    %v783 = vld [vmem:[#allocation8 + $0x58] sm:$0xff]
    %v784 = vld [vmem:[#allocation8 + $0x60] sm:$0xff]
    %v785 = vld [vmem:[#allocation8 + $0x68] sm:$0xff]
    %v786 = vld [vmem:[#allocation8 + $0x70] sm:$0xff]
    %v787 = vld [vmem:[#allocation8 + $0x78] sm:$0xff]
    %v788 = vld [vmem:[#allocation8 + $0x80] sm:$0xff]
    %v789 = vld [vmem:[#allocation8 + $0x88] sm:$0xff]
    %v790 = vld [vmem:[#allocation8 + $0x90] sm:$0xff]
    %v791 = vld [vmem:[#allocation8 + $0x98] sm:$0xff]
    %v792 = vld [vmem:[#allocation8 + $0xa0] sm:$0xff]
    %v793 = vld [vmem:[#allocation8 + $0xa8] sm:$0xff]
    %v794 = vld [vmem:[#allocation8 + $0xb0] sm:$0xff]
    %v795 = vld [vmem:[#allocation8 + $0xb8] sm:$0xff]
    %v796 = vld [vmem:[#allocation8 + $0xc0] sm:$0xff]
    %v797 = vld [vmem:[#allocation8 + $0xc8] sm:$0xff]
    %v798 = vld [vmem:[#allocation8 + $0xd0] sm:$0xff]
    %v799 = vld [vmem:[#allocation8 + $0xd8] sm:$0xff]
    %v800 = vld [vmem:[#allocation8 + $0xe0] sm:$0xff]
    %v801 = vld [vmem:[#allocation8 + $0xe8] sm:$0xff]
    %v802 = vld [vmem:[#allocation8 + $0xf0] sm:$0xff]
    %v803 = vld [vmem:[#allocation8 + $0xf8] sm:$0xff]
    %v804 = vld [vmem:[#allocation8 + $0x100] sm:$0xff]
    %v805 = vld [vmem:[#allocation8 + $0x108] sm:$0xff]
    %v806 = vld [vmem:[#allocation8 + $0x110] sm:$0xff]
    %v807 = vld [vmem:[#allocation8 + $0x118] sm:$0xff]
    %v808 = vld [vmem:[#allocation8 + $0x120] sm:$0xff]
    %v809 = vld [vmem:[#allocation8 + $0x128] sm:$0xff]
    %v810 = vld [vmem:[#allocation8 + $0x130] sm:$0xff]
    %v811 = vld [vmem:[#allocation8 + $0x138] sm:$0xff]
    %v812 = vld [vmem:[#allocation8 + $0x140] sm:$0xff]
    %v813 = vld [vmem:[#allocation8 + $0x148] sm:$0xff]
    %v814 = vld [vmem:[#allocation8 + $0x150] sm:$0xff]
    %v815 = vld [vmem:[#allocation8 + $0x158] sm:$0xff]
    %v816 = vld [vmem:[#allocation8 + $0x160] sm:$0xff]
    %v817 = vld [vmem:[#allocation8 + $0x168] sm:$0xff]
    %v818 = vld [vmem:[#allocation8 + $0x170] sm:$0xff]
    %v819 = vld [vmem:[#allocation8 + $0x178] sm:$0xff]
    %v820 = vld [vmem:[%s6] sm:$0x1]
    %v822 = vlaneseq
    %v823 = vshrl.u32 %v822, 7
    %v824 = vsub.s32 0, %v823
    %v825 = vrot.slane %v820, %v824
    %827 = vmatprep.subr.mxu0 0.0
    %828 = vmatpush1.msra.mxu0 %v772
    %829 = vmatprep.subr.mxu0 0.0
    %830 = vmatpush1.msra.mxu0 %v773
    %831 = vmatprep.subr.mxu0 0.0
    %832 = vmatpush1.msra.mxu0 %v774
    %833 = vmatprep.subr.mxu0 0.0
    %834 = vmatpush1.msra.mxu0 %v775
    %835 = vmatprep.subr.mxu0 0.0
    %836 = vmatpush1.msra.mxu0 %v776
    %837 = vmatprep.subr.mxu0 0.0
    %838 = vmatpush1.msra.mxu0 %v777
    %839 = vmatprep.subr.mxu0 0.0
    %840 = vmatpush1.msra.mxu0 %v778
    %841 = vmatprep.subr.mxu0 0.0
    %842 = vmatpush1.msra.mxu0 %v779
    %843 = vmatprep.subr.mxu0 0.0
    %844 = vmatpush1.msra.mxu0 %v780
    %845 = vmatprep.subr.mxu0 0.0
    %846 = vmatpush1.msra.mxu0 %v781
    %847 = vmatprep.subr.mxu0 0.0
    %848 = vmatpush1.msra.mxu0 %v782
    %849 = vmatprep.subr.mxu0 0.0
    %850 = vmatpush1.msra.mxu0 %v783
    %851 = vmatprep.subr.mxu0 0.0
    %852 = vmatpush1.msra.mxu0 %v784
    %853 = vmatprep.subr.mxu0 0.0
    %854 = vmatpush1.msra.mxu0 %v785
    %855 = vmatprep.subr.mxu0 0.0
    %856 = vmatpush1.msra.mxu0 %v786
    %857 = vmatprep.subr.mxu0 0.0
    %858 = vmatpush1.msra.mxu0 %v787
    %859 = vmatprep.subr.mxu0 0.0
    %860 = vmatpush1.msra.mxu0 %v788
    %861 = vmatprep.subr.mxu0 0.0
    %862 = vmatpush1.msra.mxu0 %v789
    %863 = vmatprep.subr.mxu0 0.0
    %864 = vmatpush1.msra.mxu0 %v790
    %865 = vmatprep.subr.mxu0 0.0
    %866 = vmatpush1.msra.mxu0 %v791
    %867 = vmatprep.subr.mxu0 0.0
    %868 = vmatpush1.msra.mxu0 %v792
    %869 = vmatprep.subr.mxu0 0.0
    %870 = vmatpush1.msra.mxu0 %v793
    %871 = vmatprep.subr.mxu0 0.0
    %872 = vmatpush1.msra.mxu0 %v794
    %873 = vmatprep.subr.mxu0 0.0
    %874 = vmatpush1.msra.mxu0 %v795
    %875 = vmatprep.subr.mxu0 0.0
    %876 = vmatpush1.msra.mxu0 %v796
    %877 = vmatprep.subr.mxu0 0.0
    %878 = vmatpush1.msra.mxu0 %v797
    %879 = vmatprep.subr.mxu0 0.0
    %880 = vmatpush1.msra.mxu0 %v798
    %881 = vmatprep.subr.mxu0 0.0
    %882 = vmatpush1.msra.mxu0 %v799
    %883 = vmatprep.subr.mxu0 0.0
    %884 = vmatpush1.msra.mxu0 %v800
    %885 = vmatprep.subr.mxu0 0.0
    %886 = vmatpush1.msra.mxu0 %v801
    %887 = vmatprep.subr.mxu0 0.0
    %888 = vmatpush1.msra.mxu0 %v802
    %889 = vmatprep.subr.mxu0 0.0
    %890 = vmatpush1.msra.mxu0 %v803
    %891 = vmatprep.mubr.f32.mxu0 %v770
    %892 = vmatmul.mubr.f32.gmra.mrb[0].mxu0 %v769
    %v893 = vpop.f32.mrb[0].mxu0
    %v894 = vadd.f32 %v825, %v893
    %v895 = vpop.f32.mrb[0].mxu0
    %896 = vdwg.mxu0
    %897 = vmatprep.subr.mxu0 0.0
    %898 = vmatpush1.msra.mxu0 %v804
    %899 = vmatprep.subr.mxu0 0.0
    %900 = vmatpush1.msra.mxu0 %v805
    %901 = vmatprep.subr.mxu0 0.0
    %902 = vmatpush1.msra.mxu0 %v806
    %903 = vmatprep.subr.mxu0 0.0
    %904 = vmatpush1.msra.mxu0 %v807
    %905 = vmatprep.subr.mxu0 0.0
    %906 = vmatpush1.msra.mxu0 %v808
    %907 = vmatprep.subr.mxu0 0.0
    %908 = vmatpush1.msra.mxu0 %v809
    %909 = vmatprep.subr.mxu0 0.0
    %910 = vmatpush1.msra.mxu0 %v810
    %911 = vmatprep.subr.mxu0 0.0
    %912 = vmatpush1.msra.mxu0 %v811
    %913 = vmatprep.subr.mxu0 0.0
    %914 = vmatpush1.msra.mxu0 %v812
    %915 = vmatprep.subr.mxu0 0.0
    %916 = vmatpush1.msra.mxu0 %v813
    %917 = vmatprep.subr.mxu0 0.0
    %918 = vmatpush1.msra.mxu0 %v814
    %919 = vmatprep.subr.mxu0 0.0
    %920 = vmatpush1.msra.mxu0 %v815
    %921 = vmatprep.subr.mxu0 0.0
    %922 = vmatpush1.msra.mxu0 %v816
    %923 = vmatprep.subr.mxu0 0.0
    %924 = vmatpush1.msra.mxu0 %v817
    %925 = vmatprep.subr.mxu0 0.0
    %926 = vmatpush1.msra.mxu0 %v818
    %927 = vmatprep.subr.mxu0 0.0
    %928 = vmatpush1.msra.mxu0 %v819
    %929 = vmatprep.subr.mxu0 0.0
    %930 = vmatpush1.msra.mxu0 0.0
    %931 = vmatprep.subr.mxu0 0.0
    %932 = vmatpush1.msra.mxu0 0.0
    %933 = vmatprep.subr.mxu0 0.0
    %934 = vmatpush1.msra.mxu0 0.0
    %935 = vmatprep.subr.mxu0 0.0
    %936 = vmatpush1.msra.mxu0 0.0
    %937 = vmatprep.subr.mxu0 0.0
    %938 = vmatpush1.msra.mxu0 0.0
    %939 = vmatprep.subr.mxu0 0.0
    %940 = vmatpush1.msra.mxu0 0.0
    %941 = vmatprep.subr.mxu0 0.0
    %942 = vmatpush1.msra.mxu0 0.0
    %943 = vmatprep.subr.mxu0 0.0
    %944 = vmatpush1.msra.mxu0 0.0
    %945 = vmatprep.subr.mxu0 0.0
    %946 = vmatpush1.msra.mxu0 0.0
    %947 = vmatprep.subr.mxu0 0.0
    %948 = vmatpush1.msra.mxu0 0.0
    %949 = vmatprep.subr.mxu0 0.0
    %950 = vmatpush1.msra.mxu0 0.0
    %951 = vmatprep.subr.mxu0 0.0
    %952 = vmatpush1.msra.mxu0 0.0
    %953 = vmatprep.subr.mxu0 0.0
    %954 = vmatpush1.msra.mxu0 0.0
    %955 = vmatprep.subr.mxu0 0.0
    %956 = vmatpush1.msra.mxu0 0.0
    %957 = vmatprep.subr.mxu0 0.0
    %958 = vmatpush1.msra.mxu0 0.0
    %959 = vmatprep.subr.mxu0 0.0
    %960 = vmatpush1.msra.mxu0 0.0
    %961 = vmatprep.mubr.f32.mxu0 0.0
    %962 = vmatmul.mubr.f32.gmra.mrb[0].mxu0 %v771
    %v963 = vpop.f32.mrb[0].mxu0
    %v964 = vadd.f32 %v894, %v963
    %v965 = vpop.f32.mrb[0].mxu0
    %966 = vdwg.mxu0
    %v967 = vtanh.pop %v964
    %v968 = vmul.f32 %v967, 2.0
    %969 = vst [vmem:[#allocation10] sm:$0xff] %v968
    // Predicated region
    $region46: #{tpu_custom_call.1} parent=1 // pred_check
      _
    $region47: #{tpu_custom_call.1} parent=1 // pred_check_branch
      %971 = sbr.rel (0) target = $region49
    $region48: #{tpu_custom_call.1} parent=1 // pred_region
      %s973 = ssub.s32 128, 128
      %974 = vsyncadd [#allocation4], %s973
      %s976 = sshll.u32 [#allocation10], 4
      %s977 = int_to_ptr.vmem [resolvable:$true] %s976
      %979 = dma.vmem_to_hbm [thread:$0]  %s977, 128, %s7, [#allocation4]
    $region49: #{tpu_custom_call.1} parent=1 // pred_fallthru
      _
    // Predicated region
    $region50: #{tpu_custom_call.1} parent=1 // pred_check
      _
    $region51: #{tpu_custom_call.1} parent=1 // pred_check_branch
      %981 = sbr.rel (0) target = $region53
    $region52: #{tpu_custom_call.1} parent=1 // pred_region
      %982 = dma.done [#allocation4], 128
    $region53: #{tpu_custom_call.1} parent=1 // pred_fallthru
      _
    %983 = vsyncpa [#allocation3], 1
    %984 = vsyncpa [#allocation6], 1
    %985 = vsyncpa [#allocation9], 1
    %986 = vsyncpa [#allocation4], 1

</llo_original>
